<compile_context>
chip_gen: v7x
topology: tpu7x:2x2x1
jax: 0.10.0
libtpu: 0.0.40
codegen_flags: <defaults>
</compile_context>

<pallas_src>
import functools
import math

import numpy as np
import jax
import jax.numpy as jnp
from jax import lax
from jax.experimental import pallas as pl
from jax.experimental.pallas import tpu as pltpu


def _readout_kernel(x_ref, heads_ref, w1t_ref, w2t_ref, out_ref, *,
                    num_heads, apply_mask):
    """Fused linear_1 -> gate(SiLU) -> mask_head -> linear_2, transposed layout."""
    # Put nodes on lanes: (block_n, C) -> (C, block_n).  f32 transpose of a fully
    # (8,128)-aligned tile is the canonical XLU path; cast to bf16 afterwards for
    # the single-pass MXU.
    xf = x_ref[...].astype(jnp.float32)
    xt = xf.T.astype(jnp.bfloat16)                          # (C, block_n)

    # linear_1 (transposed): (H, C) @ (C, block_n) -> (H, block_n), f32 accumulate.
    h = jnp.dot(w1t_ref[...], xt, preferred_element_type=jnp.float32)

    # nn.Activation with a single scalar irrep: gate (SiLU) on every channel.
    # exp + approximate reciprocal keep the transcendental work on the EUP slot.
    # TODO(synk): the module accepts an arbitrary `gate` callable; SiLU (the MACE
    # default) is hard-coded here.
    h = h * pl.reciprocal(1.0 + jnp.exp(-h), approx=True)

    if apply_mask and num_heads > 1:
        # mask_head: keep only the contiguous hidden-channel group of this node's
        # head.  Channels run along sublanes, nodes along lanes (heads is (1, B)).
        H, B = h.shape
        G = H // num_heads
        ch = lax.broadcasted_iota(jnp.int32, (H, B), 0)     # hidden-channel index
        lo = heads_ref[...] * G                             # (1, block_n) int32
        keep = (ch >= lo) & (ch < lo + G)
        h = jnp.where(keep, h, 0.0)

    # linear_2 (transposed): (O_pad, H) @ (H, block_n) -> (O_pad, block_n).
    # bf16 operands, f32 accumulation; store is lane-dense and sublane-aligned.
    out_t = jnp.dot(w2t_ref[...], h.astype(jnp.bfloat16),
                    preferred_element_type=jnp.float32)
    out_ref[...] = out_t.astype(out_ref.dtype)


def nonlinear_readout_block(x, w1, w2, heads=None, *, num_heads=1,
                            block_rows=1024, grid_multiple=1):
    """x: [N, C_in]   w1: [C_in, H]   w2: [H, O]   heads: optional int [N].

    block_rows:    target node-tile size (rows). 512-1024 hits ~85% of HBM BW.
    grid_multiple: round the grid length up to this multiple (use 2 on v7x so the
                   two TensorCores get a balanced 'parallel' split).
    """
    N, C = x.shape
    H = w1.shape[1]
    O = w2.shape[1]
    apply_mask = (num_heads > 1) and (heads is not None)

    # Weights: transpose to (out, in) and cast to bf16 once in the wrapper (tiny
    # arrays).  Pad the output dim to a multiple of 8 sublanes with zero rows so
    # the second matmul and the output store are fully tile-aligned.
    o_pad = (-O) % 8
    O_out = O + o_pad
    w1t = jnp.asarray(w1).T.astype(jnp.bfloat16)            # (H, C)
    w2t = jnp.asarray(w2).T.astype(jnp.bfloat16)            # (O, H)
    if o_pad:
        w2t = jnp.pad(w2t, ((0, o_pad), (0, 0)))            # (O_out, H)

    heads_arr = (jnp.zeros((N,), jnp.int32) if heads is None
                 else jnp.asarray(heads).astype(jnp.int32))

    # Grid / tiling: nodes live on lanes inside the kernel, so block_n must be a
    # multiple of 128; choose the fewest grid steps and the smallest 128-aligned
    # tile that covers N (no padding up to a fixed block multiple).
    steps = max(1, math.ceil(N / block_rows))
    if grid_multiple > 1:
        steps = math.ceil(steps / grid_multiple) * grid_multiple
    block_n = 128 * math.ceil(N / (128 * steps))
    n_total = steps * block_n

    # Zero-pad the ragged tail (zero rows are harmless: silu(0)=0, head 0, and the
    # padded columns are sliced off below).
    n_pad = n_total - N
    if n_pad:
        x = jnp.pad(x, ((0, n_pad), (0, 0)))
        heads_arr = jnp.pad(heads_arr, ((0, n_pad),))
    heads_arr = heads_arr.reshape(1, n_total)                # lane-dense head ids

    kernel = functools.partial(_readout_kernel,
                               num_heads=num_heads, apply_mask=apply_mask)

    out_t = pl.pallas_call(
        kernel,
        out_shape=jax.ShapeDtypeStruct((O_out, n_total), x.dtype),
        grid=(steps,),
        in_specs=[
            pl.BlockSpec((block_n, C), lambda n: (n, 0)),    # node features
            pl.BlockSpec((1, block_n), lambda n: (0, n)),    # head ids (lane-dense)
            pl.BlockSpec((H, C), lambda n: (0, 0)),          # w1^T (resident)
            pl.BlockSpec((O_out, H), lambda n: (0, 0)),      # w2^T (resident)
        ],
        out_specs=pl.BlockSpec((O_out, block_n), lambda n: (0, n)),  # lane-dense
        compiler_params=pltpu.CompilerParams(
            dimension_semantics=("parallel",)),              # megacore / v7x 2-TC
    )(x, heads_arr, w1t, w2t)

    # Tiny (O, N) slice + transpose back to the module's [N, O] layout.
    return out_t[:O, :N].T


if __name__ == "__main__":
    key = jax.random.PRNGKey(0)
    k1, k2, k3, k4 = jax.random.split(key, 4)

    # MACE final-layer readout configuration:
    #   irreps_in  = "128x0e"                  (invariant node features)
    #   MLP_irreps = num_heads * "16x0e"  ->  H = 32 hidden scalars
    #   gate       = SiLU
    #   irrep_out  = "num_heads x 0e"     ->  O = 2
    N, C_IN, NUM_HEADS = 520, 128, 2            # N deliberately not a tile multiple
    H = 16 * NUM_HEADS
    O = NUM_HEADS

    def bf16_exact(a):
        # Round values to bf16-representable numbers (kept as f32) so the check is
        # tight even though the kernel uses bf16 MXU operands.
        return a.astype(jnp.bfloat16).astype(jnp.float32)

    x = bf16_exact(jax.random.normal(k1, (N, C_IN), jnp.float32))
    heads = jax.random.randint(k2, (N,), 0, NUM_HEADS)

    # e3nn o3.Linear on scalar irreps: dense weight with 1/sqrt(fan_in) normalization
    # folded in.
    w1 = bf16_exact(jax.random.normal(k3, (C_IN, H), jnp.float32) / np.sqrt(C_IN))
    w2 = bf16_exact(jax.random.normal(k4, (H, O), jnp.float32) / np.sqrt(H))

    # Multi-head path (heads provided -> mask_head active), single-tile grid.
    out = nonlinear_readout_block(x, w1, w2, heads, num_heads=NUM_HEADS)
    out = jax.block_until_ready(out)

    # heads=None path (module skips mask_head).
    out_nohead = nonlinear_readout_block(x, w1, w2, None, num_heads=NUM_HEADS)
    out_nohead = jax.block_until_ready(out_nohead)

    # Multi-step grid path (exercises tile index maps + ragged padding).
    out_multi = nonlinear_readout_block(x, w1, w2, heads, num_heads=NUM_HEADS,
                                        block_rows=256)
    out_multi = jax.block_until_ready(out_multi)

    # Host float64 reference with the module's exact semantics.
    def reference(xh, w1h, w2h, heads_h, num_heads, masked):
        h = xh @ w1h
        h = h / (1.0 + np.exp(-h))                          # SiLU
        if masked and num_heads > 1:
            G = h.shape[1] // num_heads
            mask = (np.arange(h.shape[1])[None, :] // G) == heads_h[:, None]
            h = h * mask
        return h @ w2h

    xh = np.asarray(x, np.float64)
    w1h = np.asarray(w1, np.float64)
    w2h = np.asarray(w2, np.float64)
    hh = np.asarray(heads)

    ref_masked = reference(xh, w1h, w2h, hh, NUM_HEADS, True)
    ref_plain = reference(xh, w1h, w2h, hh, NUM_HEADS, False)

    # Tolerance rationale: x / w1 / w2 are bf16-exact and accumulation is f32, so the
    # deviations from the f64 reference are (a) bf16 rounding of the (non-exact)
    # hidden activations feeding linear_2 (~4e-3 rel) and (b) the EUP approximate
    # reciprocal in the sigmoid (~1e-4 rel) — both well below 2e-2 on O(1) outputs.
    # A layout or masking bug would show up as O(1) errors.
    np.testing.assert_allclose(np.asarray(out), ref_masked, rtol=2e-2, atol=2e-2)
    np.testing.assert_allclose(np.asarray(out_nohead), ref_plain, rtol=2e-2, atol=2e-2)
    np.testing.assert_allclose(np.asarray(out_multi), ref_masked, rtol=2e-2, atol=2e-2)

    print("KERNEL_OK")
</pallas_src>

<mosaic_0001>
module attributes {stable_mosaic.version = 11 : i64} {
  func.func @_readout_kernel(%arg0: i32, %arg1: memref<640x128xf32, #tpu.memory_space<vmem>>, %arg2: memref<1x640xi32, #tpu.memory_space<vmem>>, %arg3: memref<32x128xbf16, #tpu.memory_space<vmem>>, %arg4: memref<8x32xbf16, #tpu.memory_space<vmem>>, %arg5: memref<8x640xf32, #tpu.memory_space<vmem>>) attributes {dimension_semantics = [#tpu.dimension_semantics<parallel>], iteration_bounds = array<i64: 1>, scalar_prefetch = 0 : i64, scratch_operands = 0 : i64, tpu.core_type = #tpu.core_type<tc>, window_params = [{transform_indices = @transform_0, window_bounds = array<i64: 640, 128>}, {transform_indices = @transform_1, window_bounds = array<i64: 1, 640>}, {pipeline_mode = #tpu.pipeline_mode<synchronous>, transform_indices = @transform_2, window_bounds = array<i64: 32, 128>}, {pipeline_mode = #tpu.pipeline_mode<synchronous>, transform_indices = @transform_3, window_bounds = array<i64: 8, 32>}, {transform_indices = @transform_4, window_bounds = array<i64: 8, 640>}]} {
    %c0 = arith.constant 0 : index
    %c0_0 = arith.constant 0 : index
    %0 = vector.load %arg1[%c0, %c0_0] : memref<640x128xf32, #tpu.memory_space<vmem>>, vector<640x128xf32>
    %1 = tpu.transpose %0, [1, 0] : vector<640x128xf32> -> vector<128x640xf32>
    %2 = arith.truncf %1 : vector<128x640xf32> to vector<128x640xbf16>
    %c0_1 = arith.constant 0 : index
    %c0_2 = arith.constant 0 : index
    %3 = vector.load %arg3[%c0_1, %c0_2] : memref<32x128xbf16, #tpu.memory_space<vmem>>, vector<32x128xbf16>
    %cst = arith.constant dense<0.000000e+00> : vector<32x640xf32>
    %4 = tpu.matmul %3, %2, %cst {dimension_numbers = #tpu.dot_dimension_numbers<[1], [0], [0], [1], [0, 0, 1, 1], [], []>} : vector<32x128xbf16>, vector<128x640xbf16>, vector<32x640xf32> -> vector<32x640xf32>
    %cst_3 = arith.constant 0.000000e+00 : f32
    %5 = vector.broadcast %cst_3 : f32 to vector<32x640xf32>
    %6 = arith.subf %5, %4 : vector<32x640xf32>
    %7 = math.exp %6 : vector<32x640xf32>
    %cst_4 = arith.constant 1.000000e+00 : f32
    %8 = vector.broadcast %cst_4 : f32 to vector<32x640xf32>
    %9 = arith.addf %8, %7 : vector<32x640xf32>
    %10 = tpu.reciprocal %9 {approx = true} : vector<32x640xf32> -> vector<32x640xf32>
    %11 = arith.mulf %4, %10 : vector<32x640xf32>
    %12 = tpu.iota {dimensions = array<i32: 0>} : vector<32x640xi32>
    %c0_5 = arith.constant 0 : index
    %c0_6 = arith.constant 0 : index
    %13 = vector.load %arg2[%c0_5, %c0_6] : memref<1x640xi32, #tpu.memory_space<vmem>>, vector<1x640xi32>
    %c16_i32 = arith.constant 16 : i32
    %14 = vector.broadcast %c16_i32 : i32 to vector<1x640xi32>
    %15 = arith.muli %13, %14 : vector<1x640xi32>
    %16 = vector.broadcast %15 : vector<1x640xi32> to vector<32x640xi32>
    %17 = arith.cmpi sge, %12, %16 : vector<32x640xi32>
    %c16_i32_7 = arith.constant 16 : i32
    %18 = vector.broadcast %c16_i32_7 : i32 to vector<1x640xi32>
    %19 = arith.addi %15, %18 : vector<1x640xi32>
    %20 = vector.broadcast %19 : vector<1x640xi32> to vector<32x640xi32>
    %21 = arith.cmpi slt, %12, %20 : vector<32x640xi32>
    %22 = arith.andi %17, %21 : vector<32x640xi1>
    %cst_8 = arith.constant 0.000000e+00 : f32
    %23 = vector.broadcast %cst_8 : f32 to vector<32x640xf32>
    %24 = arith.select %22, %11, %23 : vector<32x640xi1>, vector<32x640xf32>
    %c0_9 = arith.constant 0 : index
    %c0_10 = arith.constant 0 : index
    %25 = vector.load %arg4[%c0_9, %c0_10] : memref<8x32xbf16, #tpu.memory_space<vmem>>, vector<8x32xbf16>
    %26 = arith.truncf %24 : vector<32x640xf32> to vector<32x640xbf16>
    %cst_11 = arith.constant dense<0.000000e+00> : vector<8x640xf32>
    %27 = tpu.matmul %25, %26, %cst_11 {dimension_numbers = #tpu.dot_dimension_numbers<[1], [0], [0], [1], [0, 0, 1, 1], [], []>} : vector<8x32xbf16>, vector<32x640xbf16>, vector<8x640xf32> -> vector<8x640xf32>
    %c0_12 = arith.constant 0 : index
    %c0_13 = arith.constant 0 : index
    %28 = vector.load %arg5[%c0_12, %c0_13] : memref<8x640xf32, #tpu.memory_space<vmem>>, vector<8x640xf32>
    tpu.vector_store %arg5[%c0_12, %c0_13], %27 {strides = array<i32>} : memref<8x640xf32, #tpu.memory_space<vmem>>, vector<8x640xf32>,
    return
  }
  func.func @transform_0(%arg0: i32) -> (i32, i32) {
    %c0_i32 = arith.constant 0 : i32
    %c0_i32_0 = arith.constant 0 : i32
    return %arg0, %c0_i32 : i32, i32
  }
  func.func @transform_1(%arg0: i32) -> (i32, i32) {
    %c0_i32 = arith.constant 0 : i32
    %c0_i32_0 = arith.constant 0 : i32
    return %c0_i32, %arg0 : i32, i32
  }
  func.func @transform_2(%arg0: i32) -> (i32, i32) {
    %c0_i32 = arith.constant 0 : i32
    %c0_i32_0 = arith.constant 0 : i32
    %c0_i32_1 = arith.constant 0 : i32
    return %c0_i32, %c0_i32_0 : i32, i32
  }
  func.func @transform_3(%arg0: i32) -> (i32, i32) {
    %c0_i32 = arith.constant 0 : i32
    %c0_i32_0 = arith.constant 0 : i32
    %c0_i32_1 = arith.constant 0 : i32
    return %c0_i32, %c0_i32_0 : i32, i32
  }
  func.func @transform_4(%arg0: i32) -> (i32, i32) {
    %c0_i32 = arith.constant 0 : i32
    %c0_i32_0 = arith.constant 0 : i32
    return %c0_i32, %arg0 : i32, i32
  }
}

</mosaic_0001>

<llo_original>
// kernel: tpu_custom_call.1
$region0: #{tpu_custom_call.1}
  #allocation0 [shape = 'u32[]', space=smem, size = 0x4, offset = 0x4, fixed_abs, tag = 'smem constant byte address 0x4 - core index']
  #allocation1 [shape = 'u32[144,128]{1,0:T(1,128)}', space=vmem, size = 0x12000, scoped, tag = 'internal scratch']
  %s0 = inlined_call_operand.hbm [shape: f32[640,128], index: 0, kind: input, shape index: {}]
  %s1 = inlined_call_operand.hbm [shape: s32[1,640], index: 1, kind: input, shape index: {}]
  %s2 = inlined_call_operand.hbm [shape: bf16[32,128], index: 2, kind: input, shape index: {}]
  %s3 = inlined_call_operand.vmem [shape: bf16[8,32], index: 3, kind: input, shape index: {}]
  %s4 = inlined_call_operand.hbm [shape: f32[8,640], index: 4, kind: output, shape index: {}]
  %s5 = sld [smem:[#allocation0]]
  $region38: #{tpu_custom_call.1} parent=0
    _
  %s7 = ssub.s32 1, %s5
  %s8 = scalar_select 0, %s7, %s5
  $region1: #{tpu_custom_call.1} parent=0
    #allocation2 [shape = 'u8[327680]{0}', space=vmem, size = 0x50000, scoped, tag = 'input window, operand 0, single buffered']
    #allocation3 [shape = 's32[1]{0}', space=sflag, size = 0x4, scoped, tag = 'scoped memory for tpu_custom_call.1']
    #allocation4 [shape = 's32[1]{0}', space=sflag, size = 0x4, scoped, tag = 'scoped memory for tpu_custom_call.1']
    #allocation5 [shape = 'u8[2560]{0}', space=vmem, size = 0xc00, scoped, tag = 'input window, operand 1, single buffered']
    #allocation6 [shape = 's32[1]{0}', space=sflag, size = 0x4, scoped, tag = 'scoped memory for tpu_custom_call.1']
    #allocation7 [shape = 'u8[8192]{0}', space=vmem, size = 0x2000, scoped, tag = 'input window, operand 2, single buffered']
    #allocation8 [shape = 'u8[20480]{0}', space=vmem, size = 0x5000, scoped, tag = 'output window, operand 0, single buffered']
    %9 = vsyncpa [#allocation3], 0
    %10 = vsyncpa [#allocation6], 0
    %11 = vsyncpa [#allocation4], 0
    // Predicated region
    $region2: #{tpu_custom_call.1} parent=1 // pred_check
      _
    $region3: #{tpu_custom_call.1} parent=1 // pred_check_branch
      %13 = sbr.rel (0) target = $region5
    $region4: #{tpu_custom_call.1} parent=1 // pred_region
      %s15 = ssub.s32 10240, 10240
      %16 = vsyncadd [#allocation3], %s15
      %s17 = sshll.u32 [#allocation2], 4
      %s18 = int_to_ptr.vmem [resolvable:$true] %s17
      %23 = dma.hbm_to_vmem [thread:$0]  %s0, 10240, %s18, [#allocation3], 128, 128, 8
    $region5: #{tpu_custom_call.1} parent=1 // pred_fallthru
      _
    // Predicated region
    $region6: #{tpu_custom_call.1} parent=1 // pred_check
      _
    $region7: #{tpu_custom_call.1} parent=1 // pred_check_branch
      %25 = sbr.rel (0) target = $region9
    $region8: #{tpu_custom_call.1} parent=1 // pred_region
      %s27 = ssub.s32 80, 80
      %28 = vsyncadd [#allocation6], %s27
      %s30 = sshll.u32 [#allocation5], 4
      %s31 = int_to_ptr.vmem [resolvable:$true] %s30
      %33 = dma.hbm_to_vmem [thread:$0]  %s1, 80, %s31, [#allocation6]
    $region9: #{tpu_custom_call.1} parent=1 // pred_fallthru
      _
    // Predicated region
    $region10: #{tpu_custom_call.1} parent=1 // pred_check
      _
    $region11: #{tpu_custom_call.1} parent=1 // pred_check_branch
      %35 = sbr.rel (0) target = $region13
    $region12: #{tpu_custom_call.1} parent=1 // pred_region
      %s37 = ssub.s32 256, 256
      %38 = vsyncadd [#allocation6], %s37
      %s39 = sshll.u32 [#allocation7], 4
      %s40 = int_to_ptr.vmem [resolvable:$true] %s39
      %45 = dma.hbm_to_vmem [thread:$0]  %s2, 256, %s40, [#allocation6], 64, 64, 4
    $region13: #{tpu_custom_call.1} parent=1 // pred_fallthru
      _
    // Predicated region
    $region14: #{tpu_custom_call.1} parent=1 // pred_check
      _
    $region15: #{tpu_custom_call.1} parent=1 // pred_check_branch
      %47 = sbr.rel (0) target = $region17
    $region16: #{tpu_custom_call.1} parent=1 // pred_region
      _
    $region17: #{tpu_custom_call.1} parent=1 // pred_fallthru
      _
    // Predicated region
    $region18: #{tpu_custom_call.1} parent=1 // pred_check
      _
    $region19: #{tpu_custom_call.1} parent=1 // pred_check_branch
      %49 = sbr.rel (0) target = $region21
    $region20: #{tpu_custom_call.1} parent=1 // pred_region
      %50 = dma.done [#allocation3], 10240
    $region21: #{tpu_custom_call.1} parent=1 // pred_fallthru
      _
    // Predicated region
    $region22: #{tpu_custom_call.1} parent=1 // pred_check
      _
    $region23: #{tpu_custom_call.1} parent=1 // pred_check_branch
      %52 = sbr.rel (0) target = $region25
    $region24: #{tpu_custom_call.1} parent=1 // pred_region
      %53 = dma.done [#allocation6], 80
    $region25: #{tpu_custom_call.1} parent=1 // pred_fallthru
      _
    // Predicated region
    $region26: #{tpu_custom_call.1} parent=1 // pred_check
      _
    $region27: #{tpu_custom_call.1} parent=1 // pred_check_branch
      %55 = sbr.rel (0) target = $region29
    $region28: #{tpu_custom_call.1} parent=1 // pred_region
      %56 = dma.done [#allocation6], 256
    $region29: #{tpu_custom_call.1} parent=1 // pred_fallthru
      _
    %v58 = vld [vmem:[#allocation2] sm:$0xff]
    %v59 = vld [vmem:[#allocation2 + $0x8] sm:$0xff]
    %v60 = vld [vmem:[#allocation2 + $0x10] sm:$0xff]
    %v61 = vld [vmem:[#allocation2 + $0x18] sm:$0xff]
    %v62 = vld [vmem:[#allocation2 + $0x20] sm:$0xff]
    %v63 = vld [vmem:[#allocation2 + $0x28] sm:$0xff]
    %v64 = vld [vmem:[#allocation2 + $0x30] sm:$0xff]
    %v65 = vld [vmem:[#allocation2 + $0x38] sm:$0xff]
    %v66 = vld [vmem:[#allocation2 + $0x40] sm:$0xff]
    %v67 = vld [vmem:[#allocation2 + $0x48] sm:$0xff]
    %v68 = vld [vmem:[#allocation2 + $0x50] sm:$0xff]
    %v69 = vld [vmem:[#allocation2 + $0x58] sm:$0xff]
    %v70 = vld [vmem:[#allocation2 + $0x60] sm:$0xff]
    %v71 = vld [vmem:[#allocation2 + $0x68] sm:$0xff]
    %v72 = vld [vmem:[#allocation2 + $0x70] sm:$0xff]
    %v73 = vld [vmem:[#allocation2 + $0x78] sm:$0xff]
    %v74 = vld [vmem:[#allocation2 + $0x80] sm:$0xff]
    %v75 = vld [vmem:[#allocation2 + $0x88] sm:$0xff]
    %v76 = vld [vmem:[#allocation2 + $0x90] sm:$0xff]
    %v77 = vld [vmem:[#allocation2 + $0x98] sm:$0xff]
    %v78 = vld [vmem:[#allocation2 + $0xa0] sm:$0xff]
    %v79 = vld [vmem:[#allocation2 + $0xa8] sm:$0xff]
    %v80 = vld [vmem:[#allocation2 + $0xb0] sm:$0xff]
    %v81 = vld [vmem:[#allocation2 + $0xb8] sm:$0xff]
    %v82 = vld [vmem:[#allocation2 + $0xc0] sm:$0xff]
    %v83 = vld [vmem:[#allocation2 + $0xc8] sm:$0xff]
    %v84 = vld [vmem:[#allocation2 + $0xd0] sm:$0xff]
    %v85 = vld [vmem:[#allocation2 + $0xd8] sm:$0xff]
    %v86 = vld [vmem:[#allocation2 + $0xe0] sm:$0xff]
    %v87 = vld [vmem:[#allocation2 + $0xe8] sm:$0xff]
    %v88 = vld [vmem:[#allocation2 + $0xf0] sm:$0xff]
    %v89 = vld [vmem:[#allocation2 + $0xf8] sm:$0xff]
    %v90 = vld [vmem:[#allocation2 + $0x100] sm:$0xff]
    %v91 = vld [vmem:[#allocation2 + $0x108] sm:$0xff]
    %v92 = vld [vmem:[#allocation2 + $0x110] sm:$0xff]
    %v93 = vld [vmem:[#allocation2 + $0x118] sm:$0xff]
    %v94 = vld [vmem:[#allocation2 + $0x120] sm:$0xff]
    %v95 = vld [vmem:[#allocation2 + $0x128] sm:$0xff]
    %v96 = vld [vmem:[#allocation2 + $0x130] sm:$0xff]
    %v97 = vld [vmem:[#allocation2 + $0x138] sm:$0xff]
    %v98 = vld [vmem:[#allocation2 + $0x140] sm:$0xff]
    %v99 = vld [vmem:[#allocation2 + $0x148] sm:$0xff]
    %v100 = vld [vmem:[#allocation2 + $0x150] sm:$0xff]
    %v101 = vld [vmem:[#allocation2 + $0x158] sm:$0xff]
    %v102 = vld [vmem:[#allocation2 + $0x160] sm:$0xff]
    %v103 = vld [vmem:[#allocation2 + $0x168] sm:$0xff]
    %v104 = vld [vmem:[#allocation2 + $0x170] sm:$0xff]
    %v105 = vld [vmem:[#allocation2 + $0x178] sm:$0xff]
    %v106 = vld [vmem:[#allocation2 + $0x180] sm:$0xff]
    %v107 = vld [vmem:[#allocation2 + $0x188] sm:$0xff]
    %v108 = vld [vmem:[#allocation2 + $0x190] sm:$0xff]
    %v109 = vld [vmem:[#allocation2 + $0x198] sm:$0xff]
    %v110 = vld [vmem:[#allocation2 + $0x1a0] sm:$0xff]
    %v111 = vld [vmem:[#allocation2 + $0x1a8] sm:$0xff]
    %v112 = vld [vmem:[#allocation2 + $0x1b0] sm:$0xff]
    %v113 = vld [vmem:[#allocation2 + $0x1b8] sm:$0xff]
    %v114 = vld [vmem:[#allocation2 + $0x1c0] sm:$0xff]
    %v115 = vld [vmem:[#allocation2 + $0x1c8] sm:$0xff]
    %v116 = vld [vmem:[#allocation2 + $0x1d0] sm:$0xff]
    %v117 = vld [vmem:[#allocation2 + $0x1d8] sm:$0xff]
    %v118 = vld [vmem:[#allocation2 + $0x1e0] sm:$0xff]
    %v119 = vld [vmem:[#allocation2 + $0x1e8] sm:$0xff]
    %v120 = vld [vmem:[#allocation2 + $0x1f0] sm:$0xff]
    %v121 = vld [vmem:[#allocation2 + $0x1f8] sm:$0xff]
    %v122 = vld [vmem:[#allocation2 + $0x200] sm:$0xff]
    %v123 = vld [vmem:[#allocation2 + $0x208] sm:$0xff]
    %v124 = vld [vmem:[#allocation2 + $0x210] sm:$0xff]
    %v125 = vld [vmem:[#allocation2 + $0x218] sm:$0xff]
    %v126 = vld [vmem:[#allocation2 + $0x220] sm:$0xff]
    %v127 = vld [vmem:[#allocation2 + $0x228] sm:$0xff]
    %v128 = vld [vmem:[#allocation2 + $0x230] sm:$0xff]
    %v129 = vld [vmem:[#allocation2 + $0x238] sm:$0xff]
    %v130 = vld [vmem:[#allocation2 + $0x240] sm:$0xff]
    %v131 = vld [vmem:[#allocation2 + $0x248] sm:$0xff]
    %v132 = vld [vmem:[#allocation2 + $0x250] sm:$0xff]
    %v133 = vld [vmem:[#allocation2 + $0x258] sm:$0xff]
    %v134 = vld [vmem:[#allocation2 + $0x260] sm:$0xff]
    %v135 = vld [vmem:[#allocation2 + $0x268] sm:$0xff]
    %v136 = vld [vmem:[#allocation2 + $0x270] sm:$0xff]
    %v137 = vld [vmem:[#allocation2 + $0x278] sm:$0xff]
    %138 = vxpose.xlu0.b32.start [1/16] %v58, 128
    %139 = vxpose.xlu0.b32.cont [2/16] %v59, 128
    %140 = vxpose.xlu0.b32.cont [3/16] %v60, 128
    %141 = vxpose.xlu0.b32.cont [4/16] %v61, 128
    %142 = vxpose.xlu0.b32.cont [5/16] %v62, 128
    %143 = vxpose.xlu0.b32.cont [6/16] %v63, 128
    %144 = vxpose.xlu0.b32.cont [7/16] %v64, 128
    %145 = vxpose.xlu0.b32.cont [8/16] %v65, 128
    %146 = vxpose.xlu0.b32.cont [9/16] %v66, 128
    %147 = vxpose.xlu0.b32.cont [10/16] %v67, 128
    %148 = vxpose.xlu0.b32.cont [11/16] %v68, 128
    %149 = vxpose.xlu0.b32.cont [12/16] %v69, 128
    %150 = vxpose.xlu0.b32.cont [13/16] %v70, 128
    %151 = vxpose.xlu0.b32.cont [14/16] %v71, 128
    %152 = vxpose.xlu0.b32.cont [15/16] %v72, 128
    %153 = vxpose.xlu0.b32.end [16/16] %v73, 128
    %v154 = vpop.trf.xlu0
    %v155 = vpop.trf.xlu0
    %v156 = vpop.trf.xlu0
    %v157 = vpop.trf.xlu0
    %v158 = vpop.trf.xlu0
    %v159 = vpop.trf.xlu0
    %v160 = vpop.trf.xlu0
    %v161 = vpop.trf.xlu0
    %v162 = vpop.trf.xlu0
    %v163 = vpop.trf.xlu0
    %v164 = vpop.trf.xlu0
    %v165 = vpop.trf.xlu0
    %v166 = vpop.trf.xlu0
    %v167 = vpop.trf.xlu0
    %v168 = vpop.trf.xlu0
    %v169 = vpop.trf.xlu0
    %170 = vxpose.xlu0.b32.start [1/16] %v74, 128
    %171 = vxpose.xlu0.b32.cont [2/16] %v75, 128
    %172 = vxpose.xlu0.b32.cont [3/16] %v76, 128
    %173 = vxpose.xlu0.b32.cont [4/16] %v77, 128
    %174 = vxpose.xlu0.b32.cont [5/16] %v78, 128
    %175 = vxpose.xlu0.b32.cont [6/16] %v79, 128
    %176 = vxpose.xlu0.b32.cont [7/16] %v80, 128
    %177 = vxpose.xlu0.b32.cont [8/16] %v81, 128
    %178 = vxpose.xlu0.b32.cont [9/16] %v82, 128
    %179 = vxpose.xlu0.b32.cont [10/16] %v83, 128
    %180 = vxpose.xlu0.b32.cont [11/16] %v84, 128
    %181 = vxpose.xlu0.b32.cont [12/16] %v85, 128
    %182 = vxpose.xlu0.b32.cont [13/16] %v86, 128
    %183 = vxpose.xlu0.b32.cont [14/16] %v87, 128
    %184 = vxpose.xlu0.b32.cont [15/16] %v88, 128
    %185 = vxpose.xlu0.b32.end [16/16] %v89, 128
    %v186 = vpop.trf.xlu0
    %v187 = vpop.trf.xlu0
    %v188 = vpop.trf.xlu0
    %v189 = vpop.trf.xlu0
    %v190 = vpop.trf.xlu0
    %v191 = vpop.trf.xlu0
    %v192 = vpop.trf.xlu0
    %v193 = vpop.trf.xlu0
    %v194 = vpop.trf.xlu0
    %v195 = vpop.trf.xlu0
    %v196 = vpop.trf.xlu0
    %v197 = vpop.trf.xlu0
    %v198 = vpop.trf.xlu0
    %v199 = vpop.trf.xlu0
    %v200 = vpop.trf.xlu0
    %v201 = vpop.trf.xlu0
    %202 = vxpose.xlu0.b32.start [1/16] %v90, 128
    %203 = vxpose.xlu0.b32.cont [2/16] %v91, 128
    %204 = vxpose.xlu0.b32.cont [3/16] %v92, 128
    %205 = vxpose.xlu0.b32.cont [4/16] %v93, 128
    %206 = vxpose.xlu0.b32.cont [5/16] %v94, 128
    %207 = vxpose.xlu0.b32.cont [6/16] %v95, 128
    %208 = vxpose.xlu0.b32.cont [7/16] %v96, 128
    %209 = vxpose.xlu0.b32.cont [8/16] %v97, 128
    %210 = vxpose.xlu0.b32.cont [9/16] %v98, 128
    %211 = vxpose.xlu0.b32.cont [10/16] %v99, 128
    %212 = vxpose.xlu0.b32.cont [11/16] %v100, 128
    %213 = vxpose.xlu0.b32.cont [12/16] %v101, 128
    %214 = vxpose.xlu0.b32.cont [13/16] %v102, 128
    %215 = vxpose.xlu0.b32.cont [14/16] %v103, 128
    %216 = vxpose.xlu0.b32.cont [15/16] %v104, 128
    %217 = vxpose.xlu0.b32.end [16/16] %v105, 128
    %v218 = vpop.trf.xlu0
    %v219 = vpop.trf.xlu0
    %v220 = vpop.trf.xlu0
    %v221 = vpop.trf.xlu0
    %v222 = vpop.trf.xlu0
    %v223 = vpop.trf.xlu0
    %v224 = vpop.trf.xlu0
    %v225 = vpop.trf.xlu0
    %v226 = vpop.trf.xlu0
    %v227 = vpop.trf.xlu0
    %v228 = vpop.trf.xlu0
    %v229 = vpop.trf.xlu0
    %v230 = vpop.trf.xlu0
    %v231 = vpop.trf.xlu0
    %v232 = vpop.trf.xlu0
    %v233 = vpop.trf.xlu0
    %234 = vxpose.xlu0.b32.start [1/16] %v106, 128
    %235 = vxpose.xlu0.b32.cont [2/16] %v107, 128
    %236 = vxpose.xlu0.b32.cont [3/16] %v108, 128
    %237 = vxpose.xlu0.b32.cont [4/16] %v109, 128
    %238 = vxpose.xlu0.b32.cont [5/16] %v110, 128
    %239 = vxpose.xlu0.b32.cont [6/16] %v111, 128
    %240 = vxpose.xlu0.b32.cont [7/16] %v112, 128
    %241 = vxpose.xlu0.b32.cont [8/16] %v113, 128
    %242 = vxpose.xlu0.b32.cont [9/16] %v114, 128
    %243 = vxpose.xlu0.b32.cont [10/16] %v115, 128
    %244 = vxpose.xlu0.b32.cont [11/16] %v116, 128
    %245 = vxpose.xlu0.b32.cont [12/16] %v117, 128
    %246 = vxpose.xlu0.b32.cont [13/16] %v118, 128
    %247 = vxpose.xlu0.b32.cont [14/16] %v119, 128
    %248 = vxpose.xlu0.b32.cont [15/16] %v120, 128
    %249 = vxpose.xlu0.b32.end [16/16] %v121, 128
    %v250 = vpop.trf.xlu0
    %v251 = vpop.trf.xlu0
    %v252 = vpop.trf.xlu0
    %v253 = vpop.trf.xlu0
    %v254 = vpop.trf.xlu0
    %v255 = vpop.trf.xlu0
    %v256 = vpop.trf.xlu0
    %v257 = vpop.trf.xlu0
    %v258 = vpop.trf.xlu0
    %v259 = vpop.trf.xlu0
    %v260 = vpop.trf.xlu0
    %v261 = vpop.trf.xlu0
    %v262 = vpop.trf.xlu0
    %v263 = vpop.trf.xlu0
    %v264 = vpop.trf.xlu0
    %v265 = vpop.trf.xlu0
    %266 = vxpose.xlu0.b32.start [1/16] %v122, 128
    %267 = vxpose.xlu0.b32.cont [2/16] %v123, 128
    %268 = vxpose.xlu0.b32.cont [3/16] %v124, 128
    %269 = vxpose.xlu0.b32.cont [4/16] %v125, 128
    %270 = vxpose.xlu0.b32.cont [5/16] %v126, 128
    %271 = vxpose.xlu0.b32.cont [6/16] %v127, 128
    %272 = vxpose.xlu0.b32.cont [7/16] %v128, 128
    %273 = vxpose.xlu0.b32.cont [8/16] %v129, 128
    %274 = vxpose.xlu0.b32.cont [9/16] %v130, 128
    %275 = vxpose.xlu0.b32.cont [10/16] %v131, 128
    %276 = vxpose.xlu0.b32.cont [11/16] %v132, 128
    %277 = vxpose.xlu0.b32.cont [12/16] %v133, 128
    %278 = vxpose.xlu0.b32.cont [13/16] %v134, 128
    %279 = vxpose.xlu0.b32.cont [14/16] %v135, 128
    %280 = vxpose.xlu0.b32.cont [15/16] %v136, 128
    %281 = vxpose.xlu0.b32.end [16/16] %v137, 128
    %v282 = vpop.trf.xlu0
    %v283 = vpop.trf.xlu0
    %v284 = vpop.trf.xlu0
    %v285 = vpop.trf.xlu0
    %v286 = vpop.trf.xlu0
    %v287 = vpop.trf.xlu0
    %v288 = vpop.trf.xlu0
    %v289 = vpop.trf.xlu0
    %v290 = vpop.trf.xlu0
    %v291 = vpop.trf.xlu0
    %v292 = vpop.trf.xlu0
    %v293 = vpop.trf.xlu0
    %v294 = vpop.trf.xlu0
    %v295 = vpop.trf.xlu0
    %v296 = vpop.trf.xlu0
    %v297 = vpop.trf.xlu0
    %v298 = vpack.c.bf16 %v155, %v154
    %v299 = vpack.c.bf16 %v187, %v186
    %v300 = vpack.c.bf16 %v219, %v218
    %v301 = vpack.c.bf16 %v251, %v250
    %v302 = vpack.c.bf16 %v283, %v282
    %v303 = vpack.c.bf16 %v157, %v156
    %v304 = vpack.c.bf16 %v189, %v188
    %v305 = vpack.c.bf16 %v221, %v220
    %v306 = vpack.c.bf16 %v253, %v252
    %v307 = vpack.c.bf16 %v285, %v284
    %v308 = vpack.c.bf16 %v159, %v158
    %v309 = vpack.c.bf16 %v191, %v190
    %v310 = vpack.c.bf16 %v223, %v222
    %v311 = vpack.c.bf16 %v255, %v254
    %v312 = vpack.c.bf16 %v287, %v286
    %v313 = vpack.c.bf16 %v161, %v160
    %v314 = vpack.c.bf16 %v193, %v192
    %v315 = vpack.c.bf16 %v225, %v224
    %v316 = vpack.c.bf16 %v257, %v256
    %v317 = vpack.c.bf16 %v289, %v288
    %v318 = vpack.c.bf16 %v163, %v162
    %v319 = vpack.c.bf16 %v195, %v194
    %v320 = vpack.c.bf16 %v227, %v226
    %v321 = vpack.c.bf16 %v259, %v258
    %v322 = vpack.c.bf16 %v291, %v290
    %v323 = vpack.c.bf16 %v165, %v164
    %v324 = vpack.c.bf16 %v197, %v196
    %v325 = vpack.c.bf16 %v229, %v228
    %v326 = vpack.c.bf16 %v261, %v260
    %v327 = vpack.c.bf16 %v293, %v292
    %v328 = vpack.c.bf16 %v167, %v166
    %v329 = vpack.c.bf16 %v199, %v198
    %v330 = vpack.c.bf16 %v231, %v230
    %v331 = vpack.c.bf16 %v263, %v262
    %v332 = vpack.c.bf16 %v295, %v294
    %v333 = vpack.c.bf16 %v169, %v168
    %v334 = vpack.c.bf16 %v201, %v200
    %v335 = vpack.c.bf16 %v233, %v232
    %v336 = vpack.c.bf16 %v265, %v264
    %v337 = vpack.c.bf16 %v297, %v296
    %v338 = vld [vmem:[#allocation7] sm:$0xf]
    %v339 = vld [vmem:[#allocation7 + $0x4] sm:$0xf]
    %v340 = vld [vmem:[#allocation7 + $0x8] sm:$0xf]
    %v341 = vld [vmem:[#allocation7 + $0xc] sm:$0xf]
    %v346 = vunpack.c.l.b16 %v338
    %v347 = vunpack.c.l.b16 %v339
    %v348 = vunpack.c.l.b16 %v340
    %v349 = vunpack.c.l.b16 %v341
    %v350 = vpack.c.b16 %v347, %v346
    %v351 = vpack.c.b16 %v349, %v348
    %354 = vmatprep.subr.bf16.mxu0 %v299
    %355 = vmatpush1.bf16.msra.mxu0 %v298
    %356 = vmatprep.subr.bf16.mxu0 %v304
    %357 = vmatpush1.bf16.msra.mxu0 %v303
    %358 = vmatprep.subr.bf16.mxu0 %v309
    %359 = vmatpush1.bf16.msra.mxu0 %v308
    %360 = vmatprep.subr.bf16.mxu0 %v314
    %361 = vmatpush1.bf16.msra.mxu0 %v313
    %362 = vmatprep.subr.bf16.mxu0 %v319
    %363 = vmatpush1.bf16.msra.mxu0 %v318
    %364 = vmatprep.subr.bf16.mxu0 %v324
    %365 = vmatpush1.bf16.msra.mxu0 %v323
    %366 = vmatprep.subr.bf16.mxu0 %v329
    %367 = vmatpush1.bf16.msra.mxu0 %v328
    %368 = vmatprep.subr.bf16.mxu0 %v334
    %369 = vmatpush1.bf16.msra.mxu0 %v333
    %370 = vmatprep.subr.bf16.mxu0 0
    %371 = vmatpush1.bf16.msra.mxu0 0
    %372 = vmatprep.subr.bf16.mxu0 0
    %373 = vmatpush1.bf16.msra.mxu0 0
    %374 = vmatprep.subr.bf16.mxu0 0
    %375 = vmatpush1.bf16.msra.mxu0 0
    %376 = vmatprep.subr.bf16.mxu0 0
    %377 = vmatpush1.bf16.msra.mxu0 0
    %378 = vmatprep.subr.bf16.mxu0 0
    %379 = vmatpush1.bf16.msra.mxu0 0
    %380 = vmatprep.subr.bf16.mxu0 0
    %381 = vmatpush1.bf16.msra.mxu0 0
    %382 = vmatprep.subr.bf16.mxu0 0
    %383 = vmatpush1.bf16.msra.mxu0 0
    %384 = vmatprep.subr.bf16.mxu0 0
    %385 = vmatpush1.bf16.msra.mxu0 0
    %386 = vmatprep.mubr.bf16.mxu0 0
    %387 = vmatmul.mubr.bf16.gmra.mrb[0].mxu0 %v350
    %v388 = vpop.f32.mrb[0].mxu0
    %v389 = vadd.f32 0.0, %v388
    %v390 = vpop.f32.mrb[0].mxu0
    %v391 = vadd.f32 0.0, %v390
    %v392 = vpop.f32.mrb[0].mxu0
    %v393 = vadd.f32 0.0, %v392
    %v394 = vpop.f32.mrb[0].mxu0
    %v395 = vadd.f32 0.0, %v394
    %396 = vmatprep.mubr.bf16.mxu0 0
    %397 = vmatmul.mubr.bf16.gmra.mrb[0].mxu0 %v351
    %v398 = vpop.f32.mrb[0].mxu0
    %v399 = vadd.f32 0.0, %v398
    %v400 = vpop.f32.mrb[0].mxu0
    %v401 = vadd.f32 0.0, %v400
    %v402 = vpop.f32.mrb[0].mxu0
    %v403 = vadd.f32 0.0, %v402
    %v404 = vpop.f32.mrb[0].mxu0
    %v405 = vadd.f32 0.0, %v404
    %406 = vdwg.mxu0
    %407 = vmatprep.subr.bf16.mxu0 %v301
    %408 = vmatpush1.bf16.msra.mxu0 %v300
    %409 = vmatprep.subr.bf16.mxu0 %v306
    %410 = vmatpush1.bf16.msra.mxu0 %v305
    %411 = vmatprep.subr.bf16.mxu0 %v311
    %412 = vmatpush1.bf16.msra.mxu0 %v310
    %413 = vmatprep.subr.bf16.mxu0 %v316
    %414 = vmatpush1.bf16.msra.mxu0 %v315
    %415 = vmatprep.subr.bf16.mxu0 %v321
    %416 = vmatpush1.bf16.msra.mxu0 %v320
    %417 = vmatprep.subr.bf16.mxu0 %v326
    %418 = vmatpush1.bf16.msra.mxu0 %v325
    %419 = vmatprep.subr.bf16.mxu0 %v331
    %420 = vmatpush1.bf16.msra.mxu0 %v330
    %421 = vmatprep.subr.bf16.mxu0 %v336
    %422 = vmatpush1.bf16.msra.mxu0 %v335
    %423 = vmatprep.subr.bf16.mxu0 0
    %424 = vmatpush1.bf16.msra.mxu0 0
    %425 = vmatprep.subr.bf16.mxu0 0
    %426 = vmatpush1.bf16.msra.mxu0 0
    %427 = vmatprep.subr.bf16.mxu0 0
    %428 = vmatpush1.bf16.msra.mxu0 0
    %429 = vmatprep.subr.bf16.mxu0 0
    %430 = vmatpush1.bf16.msra.mxu0 0
    %431 = vmatprep.subr.bf16.mxu0 0
    %432 = vmatpush1.bf16.msra.mxu0 0
    %433 = vmatprep.subr.bf16.mxu0 0
    %434 = vmatpush1.bf16.msra.mxu0 0
    %435 = vmatprep.subr.bf16.mxu0 0
    %436 = vmatpush1.bf16.msra.mxu0 0
    %437 = vmatprep.subr.bf16.mxu0 0
    %438 = vmatpush1.bf16.msra.mxu0 0
    %439 = vmatprep.mubr.bf16.mxu0 0
    %440 = vmatmul.mubr.bf16.gmra.mrb[0].mxu0 %v350
    %v441 = vpop.f32.mrb[0].mxu0
    %v442 = vadd.f32 0.0, %v441
    %v443 = vpop.f32.mrb[0].mxu0
    %v444 = vadd.f32 0.0, %v443
    %v445 = vpop.f32.mrb[0].mxu0
    %v446 = vadd.f32 0.0, %v445
    %v447 = vpop.f32.mrb[0].mxu0
    %v448 = vadd.f32 0.0, %v447
    %449 = vmatprep.mubr.bf16.mxu0 0
    %450 = vmatmul.mubr.bf16.gmra.mrb[0].mxu0 %v351
    %v451 = vpop.f32.mrb[0].mxu0
    %v452 = vadd.f32 0.0, %v451
    %v453 = vpop.f32.mrb[0].mxu0
    %v454 = vadd.f32 0.0, %v453
    %v455 = vpop.f32.mrb[0].mxu0
    %v456 = vadd.f32 0.0, %v455
    %v457 = vpop.f32.mrb[0].mxu0
    %v458 = vadd.f32 0.0, %v457
    %459 = vdwg.mxu0
    %460 = vmatprep.subr.bf16.mxu0 0
    %461 = vmatpush1.bf16.msra.mxu0 %v302
    %462 = vmatprep.subr.bf16.mxu0 0
    %463 = vmatpush1.bf16.msra.mxu0 %v307
    %464 = vmatprep.subr.bf16.mxu0 0
    %465 = vmatpush1.bf16.msra.mxu0 %v312
    %466 = vmatprep.subr.bf16.mxu0 0
    %467 = vmatpush1.bf16.msra.mxu0 %v317
    %468 = vmatprep.subr.bf16.mxu0 0
    %469 = vmatpush1.bf16.msra.mxu0 %v322
    %470 = vmatprep.subr.bf16.mxu0 0
    %471 = vmatpush1.bf16.msra.mxu0 %v327
    %472 = vmatprep.subr.bf16.mxu0 0
    %473 = vmatpush1.bf16.msra.mxu0 %v332
    %474 = vmatprep.subr.bf16.mxu0 0
    %475 = vmatpush1.bf16.msra.mxu0 %v337
    %476 = vmatprep.subr.bf16.mxu0 0
    %477 = vmatpush1.bf16.msra.mxu0 0
    %478 = vmatprep.subr.bf16.mxu0 0
    %479 = vmatpush1.bf16.msra.mxu0 0
    %480 = vmatprep.subr.bf16.mxu0 0
    %481 = vmatpush1.bf16.msra.mxu0 0
    %482 = vmatprep.subr.bf16.mxu0 0
    %483 = vmatpush1.bf16.msra.mxu0 0
    %484 = vmatprep.subr.bf16.mxu0 0
    %485 = vmatpush1.bf16.msra.mxu0 0
    %486 = vmatprep.subr.bf16.mxu0 0
    %487 = vmatpush1.bf16.msra.mxu0 0
    %488 = vmatprep.subr.bf16.mxu0 0
    %489 = vmatpush1.bf16.msra.mxu0 0
    %490 = vmatprep.subr.bf16.mxu0 0
    %491 = vmatpush1.bf16.msra.mxu0 0
    %492 = vmatprep.mubr.bf16.mxu0 0
    %493 = vmatmul.mubr.bf16.gmra.mrb[0].mxu0 %v350
    %v494 = vpop.f32.mrb[0].mxu0
    %v495 = vadd.f32 0.0, %v494
    %v496 = vpop.f32.mrb[0].mxu0
    %v497 = vpop.f32.mrb[0].mxu0
    %v498 = vadd.f32 0.0, %v497
    %v499 = vpop.f32.mrb[0].mxu0
    %500 = vmatprep.mubr.bf16.mxu0 0
    %501 = vmatmul.mubr.bf16.gmra.mrb[0].mxu0 %v351
    %v502 = vpop.f32.mrb[0].mxu0
    %v503 = vadd.f32 0.0, %v502
    %v504 = vpop.f32.mrb[0].mxu0
    %v505 = vpop.f32.mrb[0].mxu0
    %v506 = vadd.f32 0.0, %v505
    %v507 = vpop.f32.mrb[0].mxu0
    %508 = vdwg.mxu0
    %v509 = vsub.f32 0.0, %v389
    %v510 = vsub.f32 0.0, %v391
    %v511 = vsub.f32 0.0, %v442
    %v512 = vsub.f32 0.0, %v444
    %v513 = vsub.f32 0.0, %v495
    %v514 = vsub.f32 0.0, %v393
    %v515 = vsub.f32 0.0, %v395
    %v516 = vsub.f32 0.0, %v446
    %v517 = vsub.f32 0.0, %v448
    %v518 = vsub.f32 0.0, %v498
    %v519 = vsub.f32 0.0, %v399
    %v520 = vsub.f32 0.0, %v401
    %v521 = vsub.f32 0.0, %v452
    %v522 = vsub.f32 0.0, %v454
    %v523 = vsub.f32 0.0, %v503
    %v524 = vsub.f32 0.0, %v403
    %v525 = vsub.f32 0.0, %v405
    %v526 = vsub.f32 0.0, %v456
    %v527 = vsub.f32 0.0, %v458
    %v528 = vsub.f32 0.0, %v506
    %v529 = vmul.f32 %v509, 1.442695
    %v530 = vpow.pop %v529
    %v531 = vmul.f32 %v510, 1.442695
    %v532 = vpow.pop %v531
    %v533 = vmul.f32 %v511, 1.442695
    %v534 = vpow.pop %v533
    %v535 = vmul.f32 %v512, 1.442695
    %v536 = vpow.pop %v535
    %v537 = vmul.f32 %v513, 1.442695
    %v538 = vpow.pop %v537
    %v539 = vmul.f32 %v514, 1.442695
    %v540 = vpow.pop %v539
    %v541 = vmul.f32 %v515, 1.442695
    %v542 = vpow.pop %v541
    %v543 = vmul.f32 %v516, 1.442695
    %v544 = vpow.pop %v543
    %v545 = vmul.f32 %v517, 1.442695
    %v546 = vpow.pop %v545
    %v547 = vmul.f32 %v518, 1.442695
    %v548 = vpow.pop %v547
    %v549 = vmul.f32 %v519, 1.442695
    %v550 = vpow.pop %v549
    %v551 = vmul.f32 %v520, 1.442695
    %v552 = vpow.pop %v551
    %v553 = vmul.f32 %v521, 1.442695
    %v554 = vpow.pop %v553
    %v555 = vmul.f32 %v522, 1.442695
    %v556 = vpow.pop %v555
    %v557 = vmul.f32 %v523, 1.442695
    %v558 = vpow.pop %v557
    %v559 = vmul.f32 %v524, 1.442695
    %v560 = vpow.pop %v559
    %v561 = vmul.f32 %v525, 1.442695
    %v562 = vpow.pop %v561
    %v563 = vmul.f32 %v526, 1.442695
    %v564 = vpow.pop %v563
    %v565 = vmul.f32 %v527, 1.442695
    %v566 = vpow.pop %v565
    %v567 = vmul.f32 %v528, 1.442695
    %v568 = vpow.pop %v567
    %v569 = vadd.f32 %v530, 1.0
    %v570 = vadd.f32 %v532, 1.0
    %v571 = vadd.f32 %v534, 1.0
    %v572 = vadd.f32 %v536, 1.0
    %v573 = vadd.f32 %v538, 1.0
    %v574 = vadd.f32 %v540, 1.0
    %v575 = vadd.f32 %v542, 1.0
    %v576 = vadd.f32 %v544, 1.0
    %v577 = vadd.f32 %v546, 1.0
    %v578 = vadd.f32 %v548, 1.0
    %v579 = vadd.f32 %v550, 1.0
    %v580 = vadd.f32 %v552, 1.0
    %v581 = vadd.f32 %v554, 1.0
    %v582 = vadd.f32 %v556, 1.0
    %v583 = vadd.f32 %v558, 1.0
    %v584 = vadd.f32 %v560, 1.0
    %v585 = vadd.f32 %v562, 1.0
    %v586 = vadd.f32 %v564, 1.0
    %v587 = vadd.f32 %v566, 1.0
    %v588 = vadd.f32 %v568, 1.0
    %v589 = vrcp.pop %v569
    %v590 = vrcp.pop %v570
    %v591 = vrcp.pop %v571
    %v592 = vrcp.pop %v572
    %v593 = vrcp.pop %v573
    %v594 = vrcp.pop %v574
    %v595 = vrcp.pop %v575
    %v596 = vrcp.pop %v576
    %v597 = vrcp.pop %v577
    %v598 = vrcp.pop %v578
    %v599 = vrcp.pop %v579
    %v600 = vrcp.pop %v580
    %v601 = vrcp.pop %v581
    %v602 = vrcp.pop %v582
    %v603 = vrcp.pop %v583
    %v604 = vrcp.pop %v584
    %v605 = vrcp.pop %v585
    %v606 = vrcp.pop %v586
    %v607 = vrcp.pop %v587
    %v608 = vrcp.pop %v588
    %v609 = vmul.f32 %v389, %v589
    %v610 = vmul.f32 %v391, %v590
    %v611 = vmul.f32 %v442, %v591
    %v612 = vmul.f32 %v444, %v592
    %v613 = vmul.f32 %v495, %v593
    %v614 = vmul.f32 %v393, %v594
    %v615 = vmul.f32 %v395, %v595
    %v616 = vmul.f32 %v446, %v596
    %v617 = vmul.f32 %v448, %v597
    %v618 = vmul.f32 %v498, %v598
    %v619 = vmul.f32 %v399, %v599
    %v620 = vmul.f32 %v401, %v600
    %v621 = vmul.f32 %v452, %v601
    %v622 = vmul.f32 %v454, %v602
    %v623 = vmul.f32 %v503, %v603
    %v624 = vmul.f32 %v403, %v604
    %v625 = vmul.f32 %v405, %v605
    %v626 = vmul.f32 %v456, %v606
    %v627 = vmul.f32 %v458, %v607
    %v628 = vmul.f32 %v506, %v608
    %v629 = vlaneseq
    %v630 = vshrl.u32 %v629, 7
    %v631 = vadd.s32 %v630, 8
    %v632 = vadd.s32 %v630, 16
    %v633 = vadd.s32 %v630, 24
    %v634 = vld [vmem:[#allocation5] sm:$0x1f]
    %v635 = vmul.u32 %v634, 16
    %v636 = vlaneseq
    %v637 = vshrl.u32 %v636, 7
    %v638 = vsub.s32 0, %v637
    %v639 = vrot.slane %v635, %v638
    %v640 = vlaneseq
    %v641 = vshrl.u32 %v640, 7
    %v642 = vsub.s32 1, %v641
    %v643 = vrot.slane %v635, %v642
    %v644 = vlaneseq
    %v645 = vshrl.u32 %v644, 7
    %v646 = vsub.s32 2, %v645
    %v647 = vrot.slane %v635, %v646
    %v648 = vlaneseq
    %v649 = vshrl.u32 %v648, 7
    %v650 = vsub.s32 3, %v649
    %v651 = vrot.slane %v635, %v650
    %v652 = vlaneseq
    %v653 = vshrl.u32 %v652, 7
    %v654 = vsub.s32 4, %v653
    %v655 = vrot.slane %v635, %v654
    %vm656 = vcmp.ge.s32.totalorder %v630, %v639
    %vm657 = vcmp.ge.s32.totalorder %v630, %v643
    %vm658 = vcmp.ge.s32.totalorder %v630, %v647
    %vm659 = vcmp.ge.s32.totalorder %v630, %v651
    %vm660 = vcmp.ge.s32.totalorder %v630, %v655
    %vm661 = vcmp.ge.s32.totalorder %v631, %v639
    %vm662 = vcmp.ge.s32.totalorder %v631, %v643
    %vm663 = vcmp.ge.s32.totalorder %v631, %v647
    %vm664 = vcmp.ge.s32.totalorder %v631, %v651
    %vm665 = vcmp.ge.s32.totalorder %v631, %v655
    %vm666 = vcmp.ge.s32.totalorder %v632, %v639
    %vm667 = vcmp.ge.s32.totalorder %v632, %v643
    %vm668 = vcmp.ge.s32.totalorder %v632, %v647
    %vm669 = vcmp.ge.s32.totalorder %v632, %v651
    %vm670 = vcmp.ge.s32.totalorder %v632, %v655
    %vm671 = vcmp.ge.s32.totalorder %v633, %v639
    %vm672 = vcmp.ge.s32.totalorder %v633, %v643
    %vm673 = vcmp.ge.s32.totalorder %v633, %v647
    %vm674 = vcmp.ge.s32.totalorder %v633, %v651
    %vm675 = vcmp.ge.s32.totalorder %v633, %v655
    %v676 = vadd.s32 %v635, 16
    %v677 = vlaneseq
    %v678 = vshrl.u32 %v677, 7
    %v679 = vsub.s32 0, %v678
    %v680 = vrot.slane %v676, %v679
    %v681 = vlaneseq
    %v682 = vshrl.u32 %v681, 7
    %v683 = vsub.s32 1, %v682
    %v684 = vrot.slane %v676, %v683
    %v685 = vlaneseq
    %v686 = vshrl.u32 %v685, 7
    %v687 = vsub.s32 2, %v686
    %v688 = vrot.slane %v676, %v687
    %v689 = vlaneseq
    %v690 = vshrl.u32 %v689, 7
    %v691 = vsub.s32 3, %v690
    %v692 = vrot.slane %v676, %v691
    %v693 = vlaneseq
    %v694 = vshrl.u32 %v693, 7
    %v695 = vsub.s32 4, %v694
    %v696 = vrot.slane %v676, %v695
    %vm697 = vcmp.lt.s32.totalorder %v630, %v680
    %vm698 = vcmp.lt.s32.totalorder %v630, %v684
    %vm699 = vcmp.lt.s32.totalorder %v630, %v688
    %vm700 = vcmp.lt.s32.totalorder %v630, %v692
    %vm701 = vcmp.lt.s32.totalorder %v630, %v696
    %vm702 = vcmp.lt.s32.totalorder %v631, %v680
    %vm703 = vcmp.lt.s32.totalorder %v631, %v684
    %vm704 = vcmp.lt.s32.totalorder %v631, %v688
    %vm705 = vcmp.lt.s32.totalorder %v631, %v692
    %vm706 = vcmp.lt.s32.totalorder %v631, %v696
    %vm707 = vcmp.lt.s32.totalorder %v632, %v680
    %vm708 = vcmp.lt.s32.totalorder %v632, %v684
    %vm709 = vcmp.lt.s32.totalorder %v632, %v688
    %vm710 = vcmp.lt.s32.totalorder %v632, %v692
    %vm711 = vcmp.lt.s32.totalorder %v632, %v696
    %vm712 = vcmp.lt.s32.totalorder %v633, %v680
    %vm713 = vcmp.lt.s32.totalorder %v633, %v684
    %vm714 = vcmp.lt.s32.totalorder %v633, %v688
    %vm715 = vcmp.lt.s32.totalorder %v633, %v692
    %vm716 = vcmp.lt.s32.totalorder %v633, %v696
    %vm717 = vmand %vm656, %vm697
    %vm718 = vmand %vm657, %vm698
    %vm719 = vmand %vm658, %vm699
    %vm720 = vmand %vm659, %vm700
    %vm721 = vmand %vm660, %vm701
    %vm722 = vmand %vm661, %vm702
    %vm723 = vmand %vm662, %vm703
    %vm724 = vmand %vm663, %vm704
    %vm725 = vmand %vm664, %vm705
    %vm726 = vmand %vm665, %vm706
    %vm727 = vmand %vm666, %vm707
    %vm728 = vmand %vm667, %vm708
    %vm729 = vmand %vm668, %vm709
    %vm730 = vmand %vm669, %vm710
    %vm731 = vmand %vm670, %vm711
    %vm732 = vmand %vm671, %vm712
    %vm733 = vmand %vm672, %vm713
    %vm734 = vmand %vm673, %vm714
    %vm735 = vmand %vm674, %vm715
    %vm736 = vmand %vm675, %vm716
    %v737 = vsel %vm717, %v609, 0.0
    %v738 = vsel %vm718, %v610, 0.0
    %v739 = vsel %vm719, %v611, 0.0
    %v740 = vsel %vm720, %v612, 0.0
    %v741 = vsel %vm721, %v613, 0.0
    %v742 = vsel %vm722, %v614, 0.0
    %v743 = vsel %vm723, %v615, 0.0
    %v744 = vsel %vm724, %v616, 0.0
    %v745 = vsel %vm725, %v617, 0.0
    %v746 = vsel %vm726, %v618, 0.0
    %v747 = vsel %vm727, %v619, 0.0
    %v748 = vsel %vm728, %v620, 0.0
    %v749 = vsel %vm729, %v621, 0.0
    %v750 = vsel %vm730, %v622, 0.0
    %v751 = vsel %vm731, %v623, 0.0
    %v752 = vsel %vm732, %v624, 0.0
    %v753 = vsel %vm733, %v625, 0.0
    %v754 = vsel %vm734, %v626, 0.0
    %v755 = vsel %vm735, %v627, 0.0
    %v756 = vsel %vm736, %v628, 0.0
    %v757 = vld [vmem:[%s3] sm:$0xf]
    %v758 = vpack.c.bf16 %v742, %v737
    %v759 = vpack.c.bf16 %v743, %v738
    %v760 = vpack.c.bf16 %v744, %v739
    %v761 = vpack.c.bf16 %v745, %v740
    %v762 = vpack.c.bf16 %v746, %v741
    %v763 = vpack.c.bf16 %v752, %v747
    %v764 = vpack.c.bf16 %v753, %v748
    %v765 = vpack.c.bf16 %v754, %v749
    %v766 = vpack.c.bf16 %v755, %v750
    %v767 = vpack.c.bf16 %v756, %v751
    %vm768 = vcmask 261120
    %v770 = vsel %vm768, %v757, 0
    %772 = vmatprep.subr.bf16.mxu0 %v759
    %773 = vmatpush1.bf16.msra.mxu0 %v758
    %774 = vmatprep.subr.bf16.mxu0 %v764
    %775 = vmatpush1.bf16.msra.mxu0 %v763
    %776 = vmatprep.subr.bf16.mxu0 0
    %777 = vmatpush1.bf16.msra.mxu0 0
    %778 = vmatprep.subr.bf16.mxu0 0
    %779 = vmatpush1.bf16.msra.mxu0 0
    %780 = vmatprep.subr.bf16.mxu0 0
    %781 = vmatpush1.bf16.msra.mxu0 0
    %782 = vmatprep.subr.bf16.mxu0 0
    %783 = vmatpush1.bf16.msra.mxu0 0
    %784 = vmatprep.subr.bf16.mxu0 0
    %785 = vmatpush1.bf16.msra.mxu0 0
    %786 = vmatprep.subr.bf16.mxu0 0
    %787 = vmatpush1.bf16.msra.mxu0 0
    %788 = vmatprep.subr.bf16.mxu0 0
    %789 = vmatpush1.bf16.msra.mxu0 0
    %790 = vmatprep.subr.bf16.mxu0 0
    %791 = vmatpush1.bf16.msra.mxu0 0
    %792 = vmatprep.subr.bf16.mxu0 0
    %793 = vmatpush1.bf16.msra.mxu0 0
    %794 = vmatprep.subr.bf16.mxu0 0
    %795 = vmatpush1.bf16.msra.mxu0 0
    %796 = vmatprep.subr.bf16.mxu0 0
    %797 = vmatpush1.bf16.msra.mxu0 0
    %798 = vmatprep.subr.bf16.mxu0 0
    %799 = vmatpush1.bf16.msra.mxu0 0
    %800 = vmatprep.subr.bf16.mxu0 0
    %801 = vmatpush1.bf16.msra.mxu0 0
    %802 = vmatprep.subr.bf16.mxu0 0
    %803 = vmatpush1.bf16.msra.mxu0 0
    %804 = vmatprep.mubr.bf16.mxu0 0
    %805 = vmatmul.mubr.bf16.gmra.mrb[0].mxu0 %v770
    %v806 = vpop.f32.mrb[0].mxu0
    %v807 = vadd.f32 0.0, %v806
    %v808 = vpop.f32.mrb[0].mxu0
    %v809 = vadd.f32 0.0, %v808
    %v810 = vpop.f32.mrb[0].mxu0
    %v811 = vpop.f32.mrb[0].mxu0
    %812 = vdwg.mxu0
    %813 = vmatprep.subr.bf16.mxu0 %v761
    %814 = vmatpush1.bf16.msra.mxu0 %v760
    %815 = vmatprep.subr.bf16.mxu0 %v766
    %816 = vmatpush1.bf16.msra.mxu0 %v765
    %817 = vmatprep.subr.bf16.mxu0 0
    %818 = vmatpush1.bf16.msra.mxu0 0
    %819 = vmatprep.subr.bf16.mxu0 0
    %820 = vmatpush1.bf16.msra.mxu0 0
    %821 = vmatprep.subr.bf16.mxu0 0
    %822 = vmatpush1.bf16.msra.mxu0 0
    %823 = vmatprep.subr.bf16.mxu0 0
    %824 = vmatpush1.bf16.msra.mxu0 0
    %825 = vmatprep.subr.bf16.mxu0 0
    %826 = vmatpush1.bf16.msra.mxu0 0
    %827 = vmatprep.subr.bf16.mxu0 0
    %828 = vmatpush1.bf16.msra.mxu0 0
    %829 = vmatprep.subr.bf16.mxu0 0
    %830 = vmatpush1.bf16.msra.mxu0 0
    %831 = vmatprep.subr.bf16.mxu0 0
    %832 = vmatpush1.bf16.msra.mxu0 0
    %833 = vmatprep.subr.bf16.mxu0 0
    %834 = vmatpush1.bf16.msra.mxu0 0
    %835 = vmatprep.subr.bf16.mxu0 0
    %836 = vmatpush1.bf16.msra.mxu0 0
    %837 = vmatprep.subr.bf16.mxu0 0
    %838 = vmatpush1.bf16.msra.mxu0 0
    %839 = vmatprep.subr.bf16.mxu0 0
    %840 = vmatpush1.bf16.msra.mxu0 0
    %841 = vmatprep.subr.bf16.mxu0 0
    %842 = vmatpush1.bf16.msra.mxu0 0
    %843 = vmatprep.subr.bf16.mxu0 0
    %844 = vmatpush1.bf16.msra.mxu0 0
    %845 = vmatprep.mubr.bf16.mxu0 0
    %846 = vmatmul.mubr.bf16.gmra.mrb[0].mxu0 %v770
    %v847 = vpop.f32.mrb[0].mxu0
    %v848 = vadd.f32 0.0, %v847
    %v849 = vpop.f32.mrb[0].mxu0
    %v850 = vadd.f32 0.0, %v849
    %v851 = vpop.f32.mrb[0].mxu0
    %v852 = vpop.f32.mrb[0].mxu0
    %853 = vdwg.mxu0
    %854 = vmatprep.subr.bf16.mxu0 0
    %855 = vmatpush1.bf16.msra.mxu0 %v762
    %856 = vmatprep.subr.bf16.mxu0 0
    %857 = vmatpush1.bf16.msra.mxu0 %v767
    %858 = vmatprep.subr.bf16.mxu0 0
    %859 = vmatpush1.bf16.msra.mxu0 0
    %860 = vmatprep.subr.bf16.mxu0 0
    %861 = vmatpush1.bf16.msra.mxu0 0
    %862 = vmatprep.subr.bf16.mxu0 0
    %863 = vmatpush1.bf16.msra.mxu0 0
    %864 = vmatprep.subr.bf16.mxu0 0
    %865 = vmatpush1.bf16.msra.mxu0 0
    %866 = vmatprep.subr.bf16.mxu0 0
    %867 = vmatpush1.bf16.msra.mxu0 0
    %868 = vmatprep.subr.bf16.mxu0 0
    %869 = vmatpush1.bf16.msra.mxu0 0
    %870 = vmatprep.subr.bf16.mxu0 0
    %871 = vmatpush1.bf16.msra.mxu0 0
    %872 = vmatprep.subr.bf16.mxu0 0
    %873 = vmatpush1.bf16.msra.mxu0 0
    %874 = vmatprep.subr.bf16.mxu0 0
    %875 = vmatpush1.bf16.msra.mxu0 0
    %876 = vmatprep.subr.bf16.mxu0 0
    %877 = vmatpush1.bf16.msra.mxu0 0
    %878 = vmatprep.subr.bf16.mxu0 0
    %879 = vmatpush1.bf16.msra.mxu0 0
    %880 = vmatprep.subr.bf16.mxu0 0
    %881 = vmatpush1.bf16.msra.mxu0 0
    %882 = vmatprep.subr.bf16.mxu0 0
    %883 = vmatpush1.bf16.msra.mxu0 0
    %884 = vmatprep.subr.bf16.mxu0 0
    %885 = vmatpush1.bf16.msra.mxu0 0
    %886 = vmatprep.mubr.bf16.mxu0 0
    %887 = vmatmul.mubr.bf16.gmra.mrb[0].mxu0 %v770
    %v888 = vpop.f32.mrb[0].mxu0
    %v889 = vadd.f32 0.0, %v888
    %v890 = vpop.f32.mrb[0].mxu0
    %v891 = vpop.f32.mrb[0].mxu0
    %v892 = vpop.f32.mrb[0].mxu0
    %893 = vdwg.mxu0
    %894 = vst [vmem:[#allocation8] sm:$0xff] %v807
    %895 = vst [vmem:[#allocation8 + $0x8] sm:$0xff] %v809
    %896 = vst [vmem:[#allocation8 + $0x10] sm:$0xff] %v848
    %897 = vst [vmem:[#allocation8 + $0x18] sm:$0xff] %v850
    %898 = vst [vmem:[#allocation8 + $0x20] sm:$0xff] %v889
    // Predicated region
    $region30: #{tpu_custom_call.1} parent=1 // pred_check
      _
    $region31: #{tpu_custom_call.1} parent=1 // pred_check_branch
      %900 = sbr.rel (0) target = $region33
    $region32: #{tpu_custom_call.1} parent=1 // pred_region
      %s902 = ssub.s32 640, 640
      %903 = vsyncadd [#allocation4], %s902
      %s905 = sshll.u32 [#allocation8], 4
      %s906 = int_to_ptr.vmem [resolvable:$true] %s905
      %908 = dma.vmem_to_hbm [thread:$0]  %s906, 640, %s4, [#allocation4]
    $region33: #{tpu_custom_call.1} parent=1 // pred_fallthru
      _
    // Predicated region
    $region34: #{tpu_custom_call.1} parent=1 // pred_check
      _
    $region35: #{tpu_custom_call.1} parent=1 // pred_check_branch
      %910 = sbr.rel (0) target = $region37
    $region36: #{tpu_custom_call.1} parent=1 // pred_region
      %911 = dma.done [#allocation4], 640
    $region37: #{tpu_custom_call.1} parent=1 // pred_fallthru
      _
    %912 = vsyncpa [#allocation3], 1
    %913 = vsyncpa [#allocation6], 1
    %914 = vsyncpa [#allocation4], 1

</llo_original>
